<compile_context>
chip_gen: v7x
topology: tpu7x:2x2x1
jax: 0.10.0
libtpu: 0.0.40
codegen_flags: <defaults>
</compile_context>

<pallas_src>
import jax
import jax.numpy as jnp
from jax.experimental import pallas as pl
from jax.experimental.pallas import tpu as pltpu

LANES = 128
SUB_TILE = 512          # 128-row chunks per grid step => 65536 rows, ~1.5 MiB/step
SMALL_SUBLANES = 1024   # up to this many 128-row chunks (131072 rows): single block


def _affine_kernel(s_ref, c_ref, xt_ref, ot_ref):
    # s_ref : (2, N) folded weights in SMEM.    c_ref: (N,) folded bias in SMEM.
    # xt_ref: (2, SUB, 128) transposed/reshaped x1 tile in VMEM.
    # ot_ref: (N, SUB, 128) transposed/reshaped output tile in VMEM.
    n_out = ot_ref.shape[0]
    # Hoist all SMEM scalar reads out of the unrolled feature loop.
    s0 = [s_ref[0, j] for j in range(n_out)]
    s1 = [s_ref[1, j] for j in range(n_out)]
    cc = [c_ref[j] for j in range(n_out)]
    x0 = xt_ref[0]          # (SUB, 128) sublane- and lane-dense slab
    x1 = xt_ref[1]          # (SUB, 128)
    for j in range(n_out):  # static unroll over the 4 output features
        ot_ref[j] = x0 * s0[j] + x1 * s1[j] + cc[j]


def model_forward(x1, x2, fc1_w, fc1_b, cnd_w, cnd_b, *, sub_tile=SUB_TILE):
    x1 = x1.astype(jnp.float32)
    x2 = x2.astype(jnp.float32)
    w = fc1_w.astype(jnp.float32)            # (N, 2)
    b = fc1_b.astype(jnp.float32)            # (N,)
    n_out = w.shape[0]                       # 4
    assert x2.shape[0] == n_out, "x2 must have fc1-out rows so mm(a1, b1) is valid"

    # ---- tiny param-side algebraic folding (all <= (4,4); negligible) ----
    b1 = x2 @ w.T + b                                     # (N, N)
    scale = 3.0 * cnd_w.reshape(()).astype(jnp.float32)   # 3 * cnd weight
    shift = 3.0 * cnd_b.reshape(()).astype(jnp.float32)   # 3 * cnd bias
    s_mat = scale * (w.T @ b1)                            # (2, N)
    c_vec = scale * (b @ b1) + shift                      # (N,)

    # ---- lane/sublane-dense layout: (M, 2) -> (2, M) -> (2, M/128, 128) ----
    m = x1.shape[0]
    m128 = pl.cdiv(m, LANES)
    m_pad = m128 * LANES
    x1t = x1.T                                            # (2, M)
    if m_pad != m:                                        # minimal pad, only if needed
        x1t = jnp.pad(x1t, ((0, 0), (0, m_pad - m)))
    x1t3 = x1t.reshape(2, m128, LANES)                    # free, row-major contiguous

    out_shape = jax.ShapeDtypeStruct((n_out, m128, LANES), jnp.float32)
    smem_spec = pl.BlockSpec(memory_space=pltpu.MemorySpace.SMEM)

    if m128 <= SMALL_SUBLANES:
        # Small-M fast path: one block, no grid, no pipeline, no pad (for M%128==0).
        out3 = pl.pallas_call(
            _affine_kernel,
            out_shape=out_shape,
            in_specs=[
                smem_spec,                                            # S (2, N)
                smem_spec,                                            # C (N,)
                pl.BlockSpec(memory_space=pltpu.MemorySpace.VMEM),    # x1 slab
            ],
            out_specs=pl.BlockSpec(memory_space=pltpu.MemorySpace.VMEM),
        )(s_mat, c_vec, x1t3)
    else:
        # Large-M path: pipelined grid over sublane chunks, >= 2 parallel steps
        # so v7x can shard across its two TensorCores; ragged last block is
        # masked by Pallas (no wrapper pad to a tile multiple).
        grid = (pl.cdiv(m128, sub_tile),)
        out3 = pl.pallas_call(
            _affine_kernel,
            out_shape=out_shape,
            grid=grid,
            in_specs=[
                smem_spec,
                smem_spec,
                pl.BlockSpec((2, sub_tile, LANES), lambda i: (0, i, 0)),
            ],
            out_specs=pl.BlockSpec((n_out, sub_tile, LANES), lambda i: (0, i, 0)),
            compiler_params=pltpu.CompilerParams(
                dimension_semantics=("parallel",)),
        )(s_mat, c_vec, x1t3)

    out_t = out3.reshape(n_out, m_pad)[:, :m]             # free reshape + slice
    return out_t.T                                        # back to (M, N)


def _reference(x1, x2, fc1_w, fc1_b, cnd_w, cnd_b):
    a1 = x1 @ fc1_w.T + fc1_b
    b1 = x2 @ fc1_w.T + fc1_b
    a2 = a1 @ b1
    a3 = a2 * cnd_w.reshape(()) + cnd_b.reshape(())
    return a3 + a3 + a3


if __name__ == "__main__":
    key = jax.random.PRNGKey(0)
    k1, k2, k3, k4 = jax.random.split(key, 4)

    M, IN, OUT = 1024, 2, 4  # x2 gets OUT rows so torch.mm(a1, b1) is valid

    x1 = jax.random.normal(k1, (M, IN), dtype=jnp.float32)
    x2 = jax.random.normal(k2, (OUT, IN), dtype=jnp.float32)

    # Deterministic fc1 parameters (PyTorch default-style uniform init bound).
    bound = 1.0 / (IN ** 0.5)
    fc1_w = jax.random.uniform(k3, (OUT, IN), jnp.float32, -bound, bound)
    fc1_b = jax.random.uniform(k4, (OUT,), jnp.float32, -bound, bound)

    # cnd: weight filled with 0.25, bias filled with 0.0 (as in __init__).
    cnd_w = jnp.full((1, 1), 0.25, dtype=jnp.float32)
    cnd_b = jnp.zeros((1, 1), dtype=jnp.float32)

    out = jax.block_until_ready(model_forward(x1, x2, fc1_w, fc1_b, cnd_w, cnd_b))

    ref = _reference(x1, x2, fc1_w, fc1_b, cnd_w, cnd_b)
    assert out.shape == (M, OUT)
    assert jnp.allclose(out, ref, atol=1e-4, rtol=1e-4), "mismatch vs reference"

    print("KERNEL_OK")
</pallas_src>

<mosaic_0001>
module attributes {stable_mosaic.version = 11 : i64} {
  func.func @_affine_kernel(%arg0: memref<2x4xf32, #tpu.memory_space<smem>>, %arg1: memref<4xf32, #tpu.memory_space<smem>>, %arg2: memref<2x8x128xf32, #tpu.memory_space<vmem>>, %arg3: memref<4x8x128xf32, #tpu.memory_space<vmem>>) attributes {dimension_semantics = [], scalar_prefetch = 0 : i64, scratch_operands = 0 : i64, tpu.core_type = #tpu.core_type<tc>} {
    %c0 = arith.constant 0 : index
    %c0_0 = arith.constant 0 : index
    %0 = memref.load %arg0[%c0, %c0_0] : memref<2x4xf32, #tpu.memory_space<smem>>
    %c0_1 = arith.constant 0 : index
    %c1 = arith.constant 1 : index
    %1 = memref.load %arg0[%c0_1, %c1] : memref<2x4xf32, #tpu.memory_space<smem>>
    %c0_2 = arith.constant 0 : index
    %c2 = arith.constant 2 : index
    %2 = memref.load %arg0[%c0_2, %c2] : memref<2x4xf32, #tpu.memory_space<smem>>
    %c0_3 = arith.constant 0 : index
    %c3 = arith.constant 3 : index
    %3 = memref.load %arg0[%c0_3, %c3] : memref<2x4xf32, #tpu.memory_space<smem>>
    %c1_4 = arith.constant 1 : index
    %c0_5 = arith.constant 0 : index
    %4 = memref.load %arg0[%c1_4, %c0_5] : memref<2x4xf32, #tpu.memory_space<smem>>
    %c1_6 = arith.constant 1 : index
    %c1_7 = arith.constant 1 : index
    %5 = memref.load %arg0[%c1_6, %c1_7] : memref<2x4xf32, #tpu.memory_space<smem>>
    %c1_8 = arith.constant 1 : index
    %c2_9 = arith.constant 2 : index
    %6 = memref.load %arg0[%c1_8, %c2_9] : memref<2x4xf32, #tpu.memory_space<smem>>
    %c1_10 = arith.constant 1 : index
    %c3_11 = arith.constant 3 : index
    %7 = memref.load %arg0[%c1_10, %c3_11] : memref<2x4xf32, #tpu.memory_space<smem>>
    %c0_12 = arith.constant 0 : index
    %8 = memref.load %arg1[%c0_12] : memref<4xf32, #tpu.memory_space<smem>>
    %c1_13 = arith.constant 1 : index
    %9 = memref.load %arg1[%c1_13] : memref<4xf32, #tpu.memory_space<smem>>
    %c2_14 = arith.constant 2 : index
    %10 = memref.load %arg1[%c2_14] : memref<4xf32, #tpu.memory_space<smem>>
    %c3_15 = arith.constant 3 : index
    %11 = memref.load %arg1[%c3_15] : memref<4xf32, #tpu.memory_space<smem>>
    %c0_16 = arith.constant 0 : index
    %c0_17 = arith.constant 0 : index
    %c0_18 = arith.constant 0 : index
    %12 = vector.load %arg2[%c0_16, %c0_17, %c0_18] : memref<2x8x128xf32, #tpu.memory_space<vmem>>, vector<1x8x128xf32>
    %13 = vector.shape_cast %12 : vector<1x8x128xf32> to vector<8x128xf32>
    %c1_19 = arith.constant 1 : index
    %c0_20 = arith.constant 0 : index
    %c0_21 = arith.constant 0 : index
    %14 = vector.load %arg2[%c1_19, %c0_20, %c0_21] : memref<2x8x128xf32, #tpu.memory_space<vmem>>, vector<1x8x128xf32>
    %15 = vector.shape_cast %14 : vector<1x8x128xf32> to vector<8x128xf32>
    %16 = vector.broadcast %0 : f32 to vector<8x128xf32>
    %17 = arith.mulf %13, %16 : vector<8x128xf32>
    %18 = vector.broadcast %4 : f32 to vector<8x128xf32>
    %19 = arith.mulf %15, %18 : vector<8x128xf32>
    %20 = arith.addf %17, %19 : vector<8x128xf32>
    %21 = vector.broadcast %8 : f32 to vector<8x128xf32>
    %22 = arith.addf %20, %21 : vector<8x128xf32>
    %c0_22 = arith.constant 0 : index
    %c0_23 = arith.constant 0 : index
    %c0_24 = arith.constant 0 : index
    %23 = vector.load %arg3[%c0_22, %c0_23, %c0_24] : memref<4x8x128xf32, #tpu.memory_space<vmem>>, vector<1x8x128xf32>
    %24 = vector.shape_cast %23 : vector<1x8x128xf32> to vector<8x128xf32>
    %25 = vector.shape_cast %22 : vector<8x128xf32> to vector<1x8x128xf32>
    tpu.vector_store %arg3[%c0_22, %c0_23, %c0_24], %25 {strides = array<i32>} : memref<4x8x128xf32, #tpu.memory_space<vmem>>, vector<1x8x128xf32>,
    %26 = vector.broadcast %1 : f32 to vector<8x128xf32>
    %27 = arith.mulf %13, %26 : vector<8x128xf32>
    %28 = vector.broadcast %5 : f32 to vector<8x128xf32>
    %29 = arith.mulf %15, %28 : vector<8x128xf32>
    %30 = arith.addf %27, %29 : vector<8x128xf32>
    %31 = vector.broadcast %9 : f32 to vector<8x128xf32>
    %32 = arith.addf %30, %31 : vector<8x128xf32>
    %c1_25 = arith.constant 1 : index
    %c0_26 = arith.constant 0 : index
    %c0_27 = arith.constant 0 : index
    %33 = vector.load %arg3[%c1_25, %c0_26, %c0_27] : memref<4x8x128xf32, #tpu.memory_space<vmem>>, vector<1x8x128xf32>
    %34 = vector.shape_cast %33 : vector<1x8x128xf32> to vector<8x128xf32>
    %35 = vector.shape_cast %32 : vector<8x128xf32> to vector<1x8x128xf32>
    tpu.vector_store %arg3[%c1_25, %c0_26, %c0_27], %35 {strides = array<i32>} : memref<4x8x128xf32, #tpu.memory_space<vmem>>, vector<1x8x128xf32>,
    %36 = vector.broadcast %2 : f32 to vector<8x128xf32>
    %37 = arith.mulf %13, %36 : vector<8x128xf32>
    %38 = vector.broadcast %6 : f32 to vector<8x128xf32>
    %39 = arith.mulf %15, %38 : vector<8x128xf32>
    %40 = arith.addf %37, %39 : vector<8x128xf32>
    %41 = vector.broadcast %10 : f32 to vector<8x128xf32>
    %42 = arith.addf %40, %41 : vector<8x128xf32>
    %c2_28 = arith.constant 2 : index
    %c0_29 = arith.constant 0 : index
    %c0_30 = arith.constant 0 : index
    %43 = vector.load %arg3[%c2_28, %c0_29, %c0_30] : memref<4x8x128xf32, #tpu.memory_space<vmem>>, vector<1x8x128xf32>
    %44 = vector.shape_cast %43 : vector<1x8x128xf32> to vector<8x128xf32>
    %45 = vector.shape_cast %42 : vector<8x128xf32> to vector<1x8x128xf32>
    tpu.vector_store %arg3[%c2_28, %c0_29, %c0_30], %45 {strides = array<i32>} : memref<4x8x128xf32, #tpu.memory_space<vmem>>, vector<1x8x128xf32>,
    %46 = vector.broadcast %3 : f32 to vector<8x128xf32>
    %47 = arith.mulf %13, %46 : vector<8x128xf32>
    %48 = vector.broadcast %7 : f32 to vector<8x128xf32>
    %49 = arith.mulf %15, %48 : vector<8x128xf32>
    %50 = arith.addf %47, %49 : vector<8x128xf32>
    %51 = vector.broadcast %11 : f32 to vector<8x128xf32>
    %52 = arith.addf %50, %51 : vector<8x128xf32>
    %c3_31 = arith.constant 3 : index
    %c0_32 = arith.constant 0 : index
    %c0_33 = arith.constant 0 : index
    %53 = vector.load %arg3[%c3_31, %c0_32, %c0_33] : memref<4x8x128xf32, #tpu.memory_space<vmem>>, vector<1x8x128xf32>
    %54 = vector.shape_cast %53 : vector<1x8x128xf32> to vector<8x128xf32>
    %55 = vector.shape_cast %52 : vector<8x128xf32> to vector<1x8x128xf32>
    tpu.vector_store %arg3[%c3_31, %c0_32, %c0_33], %55 {strides = array<i32>} : memref<4x8x128xf32, #tpu.memory_space<vmem>>, vector<1x8x128xf32>,
    return
  }
}

</mosaic_0001>

<llo_original>
// kernel: tpu_custom_call.1
$region0: #{tpu_custom_call.1}
  #allocation0 [shape = 'u32[]', space=smem, size = 0x4, offset = 0x4, fixed_abs, tag = 'smem constant byte address 0x4 - core index']
  #allocation1 [shape = 'u32[144,128]{1,0:T(1,128)}', space=vmem, size = 0x12000, scoped, tag = 'internal scratch']
  %s0 = inlined_call_operand.hbm [shape: f32[2,4], index: 0, kind: input, shape index: {}]
  %s1 = inlined_call_operand.vmem [shape: f32[4], index: 1, kind: input, shape index: {}]
  %s2 = inlined_call_operand.hbm [shape: f32[2,8,128], index: 2, kind: input, shape index: {}]
  %s3 = inlined_call_operand.hbm [shape: f32[4,8,128], index: 3, kind: output, shape index: {}]
  %s4 = sld [smem:[#allocation0]]
  $region34: #{tpu_custom_call.1} parent=0
    _
  %s6 = ssub.s32 1, %s4
  %s7 = scalar_select 0, %s6, %s4
  $region1: #{tpu_custom_call.1} parent=0
    #allocation2 [shape = 'u8[1024]{0}', space=smem, size = 0x400, scoped, tag = 'input window, operand 0, single buffered']
    #allocation3 [shape = 's32[1]{0}', space=sflag, size = 0x4, scoped, tag = 'scoped memory for tpu_custom_call.1']
    #allocation4 [shape = 's32[1]{0}', space=sflag, size = 0x4, scoped, tag = 'scoped memory for tpu_custom_call.1']
    #allocation5 [shape = 's32[1]{0}', space=sflag, size = 0x4, scoped, tag = 'scoped memory for tpu_custom_call.1']
    #allocation6 [shape = 's32[1]{0}', space=sflag, size = 0x4, scoped, tag = 'scoped memory for tpu_custom_call.1']
    #allocation7 [shape = 'u8[512]{0}', space=smem, size = 0x200, scoped, tag = 'input window, operand 1, single buffered']
    #allocation8 [shape = 'u8[8192]{0}', space=vmem, size = 0x2000, scoped, tag = 'input window, operand 2, single buffered']
    #allocation9 [shape = 'u8[16384]{0}', space=vmem, size = 0x4000, scoped, tag = 'output window, operand 0, single buffered']
    %8 = vsyncpa [#allocation5], 0
    %9 = vsyncpa [#allocation6], 0
    %10 = vsyncpa [#allocation3], 0
    %11 = vsyncpa [#allocation4], 0
    // Predicated region
    $region2: #{tpu_custom_call.1} parent=1 // pred_check
      _
    $region3: #{tpu_custom_call.1} parent=1 // pred_check_branch
      %13 = sbr.rel (0) target = $region5
    $region4: #{tpu_custom_call.1} parent=1 // pred_region
      %s15 = ssub.s32 32, 32
      %16 = vsyncadd [#allocation5], %s15
      %19 = dma.hbm_to_smem %s0, 32, [#allocation2], [#allocation5]
    $region5: #{tpu_custom_call.1} parent=1 // pred_fallthru
      _
    // Predicated region
    $region6: #{tpu_custom_call.1} parent=1 // pred_check
      _
    $region7: #{tpu_custom_call.1} parent=1 // pred_check_branch
      %21 = sbr.rel (0) target = $region9
    $region8: #{tpu_custom_call.1} parent=1 // pred_region
      %s23 = ssub.s32 16, 16
      %24 = vsyncadd [#allocation6], %s23
      %s26 = sshll.u32 %s1, 4
      %s27 = int_to_ptr.vmem [resolvable:$true] %s26
      %29 = dma.vmem_to_smem %s27, 16, [#allocation7], [#allocation6]
    $region9: #{tpu_custom_call.1} parent=1 // pred_fallthru
      _
    // Predicated region
    $region10: #{tpu_custom_call.1} parent=1 // pred_check
      _
    $region11: #{tpu_custom_call.1} parent=1 // pred_check_branch
      %31 = sbr.rel (0) target = $region13
    $region12: #{tpu_custom_call.1} parent=1 // pred_region
      %s33 = ssub.s32 256, 256
      %34 = vsyncadd [#allocation3], %s33
      %s35 = sshll.u32 [#allocation8], 4
      %s36 = int_to_ptr.vmem [resolvable:$true] %s35
      %41 = dma.hbm_to_vmem [thread:$0]  %s2, 256, %s36, [#allocation3], 128, 128, 8
    $region13: #{tpu_custom_call.1} parent=1 // pred_fallthru
      _
    // Predicated region
    $region14: #{tpu_custom_call.1} parent=1 // pred_check
      _
    $region15: #{tpu_custom_call.1} parent=1 // pred_check_branch
      %43 = sbr.rel (0) target = $region17
    $region16: #{tpu_custom_call.1} parent=1 // pred_region
      %44 = dma.done [#allocation5], 32
    $region17: #{tpu_custom_call.1} parent=1 // pred_fallthru
      _
    // Predicated region
    $region18: #{tpu_custom_call.1} parent=1 // pred_check
      _
    $region19: #{tpu_custom_call.1} parent=1 // pred_check_branch
      %46 = sbr.rel (0) target = $region21
    $region20: #{tpu_custom_call.1} parent=1 // pred_region
      %47 = dma.done [#allocation6], 16
    $region21: #{tpu_custom_call.1} parent=1 // pred_fallthru
      _
    // Predicated region
    $region22: #{tpu_custom_call.1} parent=1 // pred_check
      _
    $region23: #{tpu_custom_call.1} parent=1 // pred_check_branch
      %49 = sbr.rel (0) target = $region25
    $region24: #{tpu_custom_call.1} parent=1 // pred_region
      %50 = dma.done [#allocation3], 256
    $region25: #{tpu_custom_call.1} parent=1 // pred_fallthru
      _
    %51 = sfence
    %s52 = sld [smem:[#allocation2]]
    %s53 = sld [smem:[#allocation2 + $0x1]]
    %s54 = sld [smem:[#allocation2 + $0x2]]
    %s55 = sld [smem:[#allocation2 + $0x3]]
    %s56 = sld [smem:[#allocation2 + $0x80]]
    %s57 = sld [smem:[#allocation2 + $0x81]]
    %s58 = sld [smem:[#allocation2 + $0x82]]
    %s59 = sld [smem:[#allocation2 + $0x83]]
    %s60 = sld [smem:[#allocation7]]
    %s61 = sld [smem:[#allocation7 + $0x1]]
    %s62 = sld [smem:[#allocation7 + $0x2]]
    %s63 = sld [smem:[#allocation7 + $0x3]]
    %v64 = vld [vmem:[#allocation8] sm:$0xff]
    %s65 = scalar_lea.vmem [#allocation8], 8
    %v66 = vld [vmem:[%s65] sm:$0xff]
    %v67 = vstv %s52
    %v68 = vmul.f32 %v64, %v67
    %v69 = vstv %s56
    %v70 = vmul.f32 %v66, %v69
    %v71 = vadd.f32 %v68, %v70
    %v72 = vstv %s60
    %v73 = vadd.f32 %v71, %v72
    %74 = vst [vmem:[#allocation9] sm:$0xff] %v73
    %v75 = vstv %s53
    %v76 = vmul.f32 %v64, %v75
    %v77 = vstv %s57
    %v78 = vmul.f32 %v66, %v77
    %v79 = vadd.f32 %v76, %v78
    %v80 = vstv %s61
    %v81 = vadd.f32 %v79, %v80
    %s82 = scalar_lea.vmem [#allocation9], 8
    %83 = vst [vmem:[%s82] sm:$0xff] %v81
    %v84 = vstv %s54
    %v85 = vmul.f32 %v64, %v84
    %v86 = vstv %s58
    %v87 = vmul.f32 %v66, %v86
    %v88 = vadd.f32 %v85, %v87
    %v89 = vstv %s62
    %v90 = vadd.f32 %v88, %v89
    %s91 = scalar_lea.vmem [#allocation9], 16
    %92 = vst [vmem:[%s91] sm:$0xff] %v90
    %v93 = vstv %s55
    %v94 = vmul.f32 %v64, %v93
    %v95 = vstv %s59
    %v96 = vmul.f32 %v66, %v95
    %v97 = vadd.f32 %v94, %v96
    %v98 = vstv %s63
    %v99 = vadd.f32 %v97, %v98
    %s100 = scalar_lea.vmem [#allocation9], 24
    %101 = vst [vmem:[%s100] sm:$0xff] %v99
    // Predicated region
    $region26: #{tpu_custom_call.1} parent=1 // pred_check
      _
    $region27: #{tpu_custom_call.1} parent=1 // pred_check_branch
      %103 = sbr.rel (0) target = $region29
    $region28: #{tpu_custom_call.1} parent=1 // pred_region
      %s105 = ssub.s32 512, 512
      %106 = vsyncadd [#allocation4], %s105
      %s107 = sshll.u32 [#allocation9], 4
      %s108 = int_to_ptr.vmem [resolvable:$true] %s107
      %113 = dma.vmem_to_hbm [thread:$0]  %s108, 512, %s3, [#allocation4], 128, 128, 8
    $region29: #{tpu_custom_call.1} parent=1 // pred_fallthru
      _
    // Predicated region
    $region30: #{tpu_custom_call.1} parent=1 // pred_check
      _
    $region31: #{tpu_custom_call.1} parent=1 // pred_check_branch
      %115 = sbr.rel (0) target = $region33
    $region32: #{tpu_custom_call.1} parent=1 // pred_region
      %116 = dma.done [#allocation4], 512
    $region33: #{tpu_custom_call.1} parent=1 // pred_fallthru
      _
    %117 = vsyncpa [#allocation3], 1
    %118 = vsyncpa [#allocation4], 1
    %119 = vsyncpa [#allocation5], 1
    %120 = vsyncpa [#allocation6], 1

</llo_original>
